<compile_context>
chip_gen: v7x
topology: tpu7x:2x2x1
jax: 0.10.0
libtpu: 0.0.40
codegen_flags: <defaults>
</compile_context>

<pallas_src>
import math

import jax
import jax.numpy as jnp
from jax.experimental import pallas as pl
from jax.experimental.pallas import tpu as pltpu


def _round_up(n, m):
    return ((n + m - 1) // m) * m


def _se_kernel(x_ref, w1_ref, w2_ref, o_ref):
    x = x_ref[...]                                     # (tm, d_in), x.dtype
    x_f32 = x.astype(jnp.float32)
    # Squeeze-excitation MLP on the MXU: bf16 operands, f32 accumulation.
    h = jnp.dot(x.astype(jnp.bfloat16), w1_ref[...],
                preferred_element_type=jnp.float32)    # (tm, d_emb_p)
    h = jnp.maximum(h, 0.0)                            # ReLU
    y = jnp.dot(h.astype(jnp.bfloat16), w2_ref[...],
                preferred_element_type=jnp.float32)    # (tm, d_in)
    # Sigmoid with exp + approximate reciprocal, both on the EUP slot.
    gate = pl.reciprocal(1.0 + jnp.exp(-y), approx=True)
    # Channel gating (residual read of x reused from the same VMEM tile).
    o_ref[...] = (gate * x_f32).astype(o_ref.dtype)


def _const_weight_spec(shape):
    """Grid-invariant weight tile; single-buffered to halve its VMEM footprint."""
    try:
        return pl.BlockSpec(shape, lambda i: (0, 0), pipeline_mode=pl.Buffered(1))
    except (AttributeError, TypeError):
        # Older JAX without pipeline_mode / Buffered: default (double) buffering.
        return pl.BlockSpec(shape, lambda i: (0, 0))


def se_layer(x, w1, w2, *, tm=None, vmem_limit_bytes=None):
    """x: (..., d_in).  w1: (d_in, d_emb).  w2: (d_emb, d_in).  Returns x.shape / x.dtype."""
    orig_shape = x.shape
    d_in = orig_shape[-1]
    d_emb = w1.shape[1]
    assert w1.shape == (d_in, d_emb) and w2.shape == (d_emb, d_in)
    # TODO(synk): d_in should ideally be a multiple of 128 for fully lane-dense
    # stores; other values still compile (block spans the full last dim) but use
    # masked partial stores.

    rows = math.prod(orig_shape[:-1])
    x2d = x.reshape(rows, d_in)

    # ---- row tile selection -------------------------------------------------
    if tm is None:
        tm = (2 << 20) // max(1, 4 * d_in)        # ~2 MiB of f32 rows per tile
        tm = min(max(tm, 256), 1024)
    # >= 2 grid steps whenever rows allow (v7x dual-TensorCore split of the
    # "parallel" row axis); multiple of 16 for bf16 sublane packing.
    tm = min(tm, _round_up(pl.cdiv(rows, 2), 16))
    tm = max(16, _round_up(tm, 16))
    grid = (pl.cdiv(rows, tm),)                   # ragged last block -> masked stores

    # ---- weight prep: bf16, d_emb zero-padded to a lane-dense multiple of 128 -
    d_emb_p = _round_up(d_emb, 128)
    w1p = w1.astype(jnp.bfloat16)
    w2p = w2.astype(jnp.bfloat16)
    if d_emb_p != d_emb:
        w1p = jnp.pad(w1p, ((0, 0), (0, d_emb_p - d_emb)))
        w2p = jnp.pad(w2p, ((0, d_emb_p - d_emb), (0, 0)))

    # ---- explicit VMEM budget -------------------------------------------------
    if vmem_limit_bytes is None:
        itemsize = jnp.dtype(x.dtype).itemsize
        need = (4 * tm * d_in * itemsize           # x + out tiles, double-buffered
                + 2 * (2 * d_in * d_emb_p) * 2     # W1 + W2 bf16 (<= 2 buffers each)
                + 2 * tm * (d_in + d_emb_p) * 4)   # f32 intermediates headroom
        vmem_limit_bytes = int(min(max(need + (4 << 20), 32 << 20), 96 << 20))

    out2d = pl.pallas_call(
        _se_kernel,
        out_shape=jax.ShapeDtypeStruct((rows, d_in), x.dtype),
        grid=grid,
        in_specs=[
            pl.BlockSpec((tm, d_in), lambda i: (i, 0)),   # x row tile
            _const_weight_spec((d_in, d_emb_p)),          # W1 (grid-invariant)
            _const_weight_spec((d_emb_p, d_in)),          # W2 (grid-invariant)
        ],
        out_specs=pl.BlockSpec((tm, d_in), lambda i: (i, 0)),
        compiler_params=pltpu.CompilerParams(
            dimension_semantics=("parallel",),
            vmem_limit_bytes=vmem_limit_bytes),
    )(x2d, w1p, w2p)

    return out2d.reshape(orig_shape)


def _reference_bf16(x, w1, w2):
    """Pure-JAX reference with the same bf16-operand / f32-accum matmuls."""
    xf = x.astype(jnp.float32)
    h = jnp.dot(x.astype(jnp.bfloat16), w1.astype(jnp.bfloat16),
                preferred_element_type=jnp.float32)
    h = jnp.maximum(h, 0.0)
    y = jnp.dot(h.astype(jnp.bfloat16), w2.astype(jnp.bfloat16),
                preferred_element_type=jnp.float32)
    return jax.nn.sigmoid(y) * xf


def _reference_f32(x, w1, w2):
    """Full-precision reference (matches the PyTorch module exactly)."""
    xf = x.astype(jnp.float32)
    h = jnp.maximum(xf @ w1, 0.0)
    return jax.nn.sigmoid(h @ w2) * xf


if __name__ == "__main__":
    # Small demo: x is (batch, seq, input_shape); SELayer(input_shape, embedding_shape).
    # rows = 144 is NOT a multiple of the chosen row tile -> exercises the ragged
    # last block / masked-writeback path.
    batch, seq, d_in, d_emb = 2, 72, 128, 32

    key = jax.random.PRNGKey(0)
    kx, k1, k2 = jax.random.split(key, 3)
    x = jax.random.normal(kx, (batch, seq, d_in), dtype=jnp.float32)

    # torch.nn.Linear default init (bias=False): uniform(-1/sqrt(fan_in), +1/sqrt(fan_in)),
    # stored transposed for x @ W.
    b1 = 1.0 / math.sqrt(d_in)
    b2 = 1.0 / math.sqrt(d_emb)
    w1 = jax.random.uniform(k1, (d_in, d_emb), jnp.float32, -b1, b1)
    w2 = jax.random.uniform(k2, (d_emb, d_in), jnp.float32, -b2, b2)

    out = jax.block_until_ready(se_layer(x, w1, w2))
    assert out.shape == x.shape and out.dtype == x.dtype
    assert bool(jnp.all(jnp.isfinite(out)))

    # Tight check against a reference mirroring the kernel's bf16 MXU math.
    ref_b = _reference_bf16(x, w1, w2)
    assert jnp.allclose(out, ref_b, atol=1.5e-2, rtol=1.5e-2), "bf16-matched reference mismatch"

    # Loose sanity check against the exact f32 PyTorch-equivalent math.
    ref_f = _reference_f32(x, w1, w2)
    assert jnp.allclose(out, ref_f, atol=6e-2, rtol=6e-2), "f32 reference mismatch"

    # bf16 activation path (halves x / out HBM traffic; kernel is mem-bound).
    out_bf = jax.block_until_ready(se_layer(x.astype(jnp.bfloat16), w1, w2))
    assert out_bf.shape == x.shape and out_bf.dtype == jnp.bfloat16
    assert jnp.allclose(out_bf.astype(jnp.float32), ref_f, atol=1e-1, rtol=1e-1), \
        "bf16-activation path mismatch"

    print("KERNEL_OK")
</pallas_src>

<mosaic_0001>
module attributes {stable_mosaic.version = 11 : i64} {
  func.func @_se_kernel(%arg0: i32, %arg1: memref<80x128xf32, #tpu.memory_space<vmem>>, %arg2: memref<128x128xbf16, #tpu.memory_space<vmem>>, %arg3: memref<128x128xbf16, #tpu.memory_space<vmem>>, %arg4: memref<80x128xf32, #tpu.memory_space<vmem>>) attributes {dimension_semantics = [#tpu.dimension_semantics<parallel>], iteration_bounds = array<i64: 2>, scalar_prefetch = 0 : i64, scratch_operands = 0 : i64, tpu.core_type = #tpu.core_type<tc>, window_params = [{transform_indices = @transform_0, window_bounds = array<i64: 80, 128>}, {pipeline_mode = #tpu.pipeline_mode<synchronous>, transform_indices = @transform_1, window_bounds = array<i64: 128, 128>}, {pipeline_mode = #tpu.pipeline_mode<synchronous>, transform_indices = @transform_2, window_bounds = array<i64: 128, 128>}, {transform_indices = @transform_3, window_bounds = array<i64: 80, 128>}]} {
    %c0 = arith.constant 0 : index
    %c0_0 = arith.constant 0 : index
    %0 = vector.load %arg1[%c0, %c0_0] : memref<80x128xf32, #tpu.memory_space<vmem>>, vector<80x128xf32>
    %1 = arith.truncf %0 : vector<80x128xf32> to vector<80x128xbf16>
    %c0_1 = arith.constant 0 : index
    %c0_2 = arith.constant 0 : index
    %2 = vector.load %arg2[%c0_1, %c0_2] : memref<128x128xbf16, #tpu.memory_space<vmem>>, vector<128x128xbf16>
    %cst = arith.constant dense<0.000000e+00> : vector<80x128xf32>
    %3 = tpu.matmul %1, %2, %cst {dimension_numbers = #tpu.dot_dimension_numbers<[1], [0], [0], [1], [0, 0, 1, 1], [], []>} : vector<80x128xbf16>, vector<128x128xbf16>, vector<80x128xf32> -> vector<80x128xf32>
    %cst_3 = arith.constant 0.000000e+00 : f32
    %4 = vector.broadcast %cst_3 : f32 to vector<80x128xf32>
    %5 = arith.maximumf %3, %4 : vector<80x128xf32>
    %6 = arith.truncf %5 : vector<80x128xf32> to vector<80x128xbf16>
    %c0_4 = arith.constant 0 : index
    %c0_5 = arith.constant 0 : index
    %7 = vector.load %arg3[%c0_4, %c0_5] : memref<128x128xbf16, #tpu.memory_space<vmem>>, vector<128x128xbf16>
    %cst_6 = arith.constant dense<0.000000e+00> : vector<80x128xf32>
    %8 = tpu.matmul %6, %7, %cst_6 {dimension_numbers = #tpu.dot_dimension_numbers<[1], [0], [0], [1], [0, 0, 1, 1], [], []>} : vector<80x128xbf16>, vector<128x128xbf16>, vector<80x128xf32> -> vector<80x128xf32>
    %cst_7 = arith.constant 0.000000e+00 : f32
    %9 = vector.broadcast %cst_7 : f32 to vector<80x128xf32>
    %10 = arith.subf %9, %8 : vector<80x128xf32>
    %11 = math.exp %10 : vector<80x128xf32>
    %cst_8 = arith.constant 1.000000e+00 : f32
    %12 = vector.broadcast %cst_8 : f32 to vector<80x128xf32>
    %13 = arith.addf %12, %11 : vector<80x128xf32>
    %14 = tpu.reciprocal %13 {approx = true} : vector<80x128xf32> -> vector<80x128xf32>
    %15 = arith.mulf %14, %0 : vector<80x128xf32>
    %c0_9 = arith.constant 0 : index
    %c0_10 = arith.constant 0 : index
    %16 = vector.load %arg4[%c0_9, %c0_10] : memref<80x128xf32, #tpu.memory_space<vmem>>, vector<80x128xf32>
    tpu.vector_store %arg4[%c0_9, %c0_10], %15 {strides = array<i32>} : memref<80x128xf32, #tpu.memory_space<vmem>>, vector<80x128xf32>,
    return
  }
  func.func @transform_0(%arg0: i32) -> (i32, i32) {
    %c0_i32 = arith.constant 0 : i32
    %c0_i32_0 = arith.constant 0 : i32
    return %arg0, %c0_i32 : i32, i32
  }
  func.func @transform_1(%arg0: i32) -> (i32, i32) {
    %c0_i32 = arith.constant 0 : i32
    %c0_i32_0 = arith.constant 0 : i32
    %c0_i32_1 = arith.constant 0 : i32
    return %c0_i32, %c0_i32_0 : i32, i32
  }
  func.func @transform_2(%arg0: i32) -> (i32, i32) {
    %c0_i32 = arith.constant 0 : i32
    %c0_i32_0 = arith.constant 0 : i32
    %c0_i32_1 = arith.constant 0 : i32
    return %c0_i32, %c0_i32_0 : i32, i32
  }
  func.func @transform_3(%arg0: i32) -> (i32, i32) {
    %c0_i32 = arith.constant 0 : i32
    %c0_i32_0 = arith.constant 0 : i32
    return %arg0, %c0_i32 : i32, i32
  }
}

</mosaic_0001>

<llo_original>
// kernel: tpu_custom_call.1
$region0: #{tpu_custom_call.1}
  #allocation0 [shape = 'u32[]', space=smem, size = 0x4, offset = 0x4, fixed_abs, tag = 'smem constant byte address 0x4 - core index']
  #allocation1 [shape = 'u32[144,128]{1,0:T(1,128)}', space=vmem, size = 0x12000, scoped, tag = 'internal scratch']
  %s0 = inlined_call_operand.hbm [shape: f32[144,128], index: 0, kind: input, shape index: {}]
  %s1 = inlined_call_operand.hbm [shape: bf16[128,128], index: 1, kind: input, shape index: {}]
  %s2 = inlined_call_operand.hbm [shape: bf16[128,128], index: 2, kind: input, shape index: {}]
  %s3 = inlined_call_operand.hbm [shape: f32[144,128], index: 3, kind: output, shape index: {}]
  %s4 = sld [smem:[#allocation0]]
  $region57: #{tpu_custom_call.1} parent=0
    _
  %s6 = ssub.s32 1, %s4
  %s7 = scalar_select 0, %s6, %s4
  $region1: #{tpu_custom_call.1} parent=0
    #allocation2 [shape = 'u8[81920]{0}', space=vmem, size = 0x14000, scoped, tag = 'input window, operand 0']
    #allocation3 [shape = 's32[2]{0}', space=sflag, size = 0x8, scoped, tag = 'scoped memory for tpu_custom_call.1']
    #allocation4 [shape = 's32[2]{0}', space=sflag, size = 0x8, scoped, tag = 'scoped memory for tpu_custom_call.1']
    #allocation5 [shape = 'u8[32768]{0}', space=vmem, size = 0x8000, scoped, tag = 'input window, operand 1, single buffered']
    #allocation6 [shape = 's32[1]{0}', space=sflag, size = 0x4, scoped, tag = 'scoped memory for tpu_custom_call.1']
    #allocation7 [shape = 'u8[32768]{0}', space=vmem, size = 0x8000, scoped, tag = 'input window, operand 2, single buffered']
    #allocation8 [shape = 'u8[81920]{0}', space=vmem, size = 0x14000, scoped, tag = 'output window, operand 0']
    %8 = vsyncpa [#allocation3], 0
    %s9 = scalar_lea.sflag [#allocation3], 1
    %10 = vsyncpa %s9, 0
    %11 = vsyncpa [#allocation6], 0
    %12 = vsyncpa [#allocation4], 0
    %s13 = scalar_lea.sflag [#allocation4], 1
    %14 = vsyncpa %s13, 0
    loop: start=0, step=1, limit=4
    $region2: #{tpu_custom_call.1} parent=1 // loop_pre_header
      _
    $region3: #{tpu_custom_call.1} parent=1 // loop_header
      %s16 = sphi 0, %s20
      %p17 = scmp.ge.s32.totalorder %s16, 4
      %s26 = sphi 0, %s28
      %s29 = sphi 0, %s26
      %s30 = sphi 0, %s29
      %s46 = sphi 0, %s30
      %s50 = sphi 0, %s50
      %s52 = sphi 0, %s50
      %s53 = sphi 0, %s52
      %s67 = sphi 0, %s53
      %s71 = sphi 0, %s71
      %s73 = sphi 0, %s71
      %s74 = sphi 0, %s73
      %s88 = sphi 0, %s74
      %s94 = sphi 0, %s96
      %s97 = sphi 0, %s94
      %s98 = sphi 0, %s97
      %s114 = sphi 0, %s98
    $region4: #{tpu_custom_call.1} parent=1 // loop_header_branch
      %19 = sbr.rel (%p17) target = $region8
    $region5: #{tpu_custom_call.1} parent=1 // loop_body
      %s21 = ssub.s32 %s16, 1
      %s22 = ssub.s32 %s16, 2
      %s23 = sadd.s32 %s16, 1
      %s24 = ssub.s32 %s16, %s23
      %p25 = scmp.eq.s32.totalorder %s24, 0
      %s27 = sadd.s32 %s26, 1
      %s28 = scalar_select %p25, %s26, %s27
      %p31 = pneg %p25
      %p32 = scmp.eq.s32.totalorder %s16, 1
      %p33 = por %p31, %p32
      %p34 = scmp.ne.s32.totalorder %s26, %s29
      %p35 = scmp.eq.s32.totalorder %s16, 0
      %p36 = por %p34, %p35
      %p37 = scmp.ne.s32.totalorder %s26, %s29
      %p38 = scmp.eq.s32.totalorder %s21, 1
      %p39 = por %p37, %p38
      %p40 = scmp.ne.s32.totalorder %s29, %s30
      %p41 = scmp.eq.s32.totalorder %s21, 0
      %p42 = por %p40, %p41
      %p43 = scmp.ne.s32.totalorder %s29, %s30
      %p44 = scmp.eq.s32.totalorder %s22, 1
      %p45 = por %p43, %p44
      %p47 = scmp.ne.s32.totalorder %s30, %s46
      %p48 = scmp.eq.s32.totalorder %s22, 0
      %p49 = por %p47, %p48
      %s51 = sadd.s32 %s50, 1
      %p54 = scmp.eq.s32.totalorder %s16, 1
      %p55 = scmp.ne.s32.totalorder %s50, %s52
      %p56 = scmp.eq.s32.totalorder %s16, 0
      %p57 = por %p55, %p56
      %p58 = scmp.ne.s32.totalorder %s50, %s52
      %p59 = scmp.eq.s32.totalorder %s21, 1
      %p60 = por %p58, %p59
      %p61 = scmp.ne.s32.totalorder %s52, %s53
      %p62 = scmp.eq.s32.totalorder %s21, 0
      %p63 = por %p61, %p62
      %p64 = scmp.ne.s32.totalorder %s52, %s53
      %p65 = scmp.eq.s32.totalorder %s22, 1
      %p66 = por %p64, %p65
      %p68 = scmp.ne.s32.totalorder %s53, %s67
      %p69 = scmp.eq.s32.totalorder %s22, 0
      %p70 = por %p68, %p69
      %s72 = sadd.s32 %s71, 1
      %p75 = scmp.eq.s32.totalorder %s16, 1
      %p76 = scmp.ne.s32.totalorder %s71, %s73
      %p77 = scmp.eq.s32.totalorder %s16, 0
      %p78 = por %p76, %p77
      %p79 = scmp.ne.s32.totalorder %s71, %s73
      %p80 = scmp.eq.s32.totalorder %s21, 1
      %p81 = por %p79, %p80
      %p82 = scmp.ne.s32.totalorder %s73, %s74
      %p83 = scmp.eq.s32.totalorder %s21, 0
      %p84 = por %p82, %p83
      %p85 = scmp.ne.s32.totalorder %s73, %s74
      %p86 = scmp.eq.s32.totalorder %s22, 1
      %p87 = por %p85, %p86
      %p89 = scmp.ne.s32.totalorder %s74, %s88
      %p90 = scmp.eq.s32.totalorder %s22, 0
      %p91 = por %p89, %p90
      %s92 = ssub.s32 %s16, %s23
      %p93 = scmp.eq.s32.totalorder %s92, 0
      %s95 = sadd.s32 %s94, 1
      %s96 = scalar_select %p93, %s94, %s95
      %p99 = pneg %p93
      %p100 = scmp.eq.s32.totalorder %s16, 1
      %p101 = por %p99, %p100
      %p102 = scmp.ne.s32.totalorder %s94, %s97
      %p103 = scmp.eq.s32.totalorder %s16, 0
      %p104 = por %p102, %p103
      %p105 = scmp.ne.s32.totalorder %s94, %s97
      %p106 = scmp.eq.s32.totalorder %s21, 1
      %p107 = por %p105, %p106
      %p108 = scmp.ne.s32.totalorder %s97, %s98
      %p109 = scmp.eq.s32.totalorder %s21, 0
      %p110 = por %p108, %p109
      %p111 = scmp.ne.s32.totalorder %s97, %s98
      %p112 = scmp.eq.s32.totalorder %s22, 1
      %p113 = por %p111, %p112
      %p115 = scmp.ne.s32.totalorder %s98, %s114
      %p116 = scmp.eq.s32.totalorder %s22, 0
      %p117 = por %p115, %p116
      %p118 = scmp.le.s32.totalorder 1, %s16
      %p119 = scmp.lt.s32.totalorder %s16, 3
      %p120 = pnand %p118, %p119
      %p121 = pneg %p120
      // Predicated region
      $region9: #{tpu_custom_call.1} parent=5 // pred_check
        _
      $region10: #{tpu_custom_call.1} parent=5 // pred_check_branch
        %123 = sbr.rel (%p120) target = $region12
      $region11: #{tpu_custom_call.1} parent=5 // pred_region
        %s124 = ssub.s32 %s16, 1
        // Predicated region
        $region13: #{tpu_custom_call.1} parent=11 // pred_check
          %p125 = pneg %p63
        $region14: #{tpu_custom_call.1} parent=11 // pred_check_branch
          %127 = sbr.rel (%p125) target = $region16
        $region15: #{tpu_custom_call.1} parent=11 // pred_region
          %s129 = ssub.s32 1024, 1024
          %130 = vsyncadd [#allocation6], %s129
          %s131 = sshll.u32 [#allocation5], 4
          %s132 = int_to_ptr.vmem [resolvable:$true] %s131
          %137 = dma.hbm_to_vmem [thread:$0]  %s1, 1024, %s132, [#allocation6], 64, 64, 4
        $region16: #{tpu_custom_call.1} parent=11 // pred_fallthru
          _
        // Predicated region
        $region17: #{tpu_custom_call.1} parent=11 // pred_check
          %p138 = pneg %p84
        $region18: #{tpu_custom_call.1} parent=11 // pred_check_branch
          %140 = sbr.rel (%p138) target = $region20
        $region19: #{tpu_custom_call.1} parent=11 // pred_region
          %s142 = ssub.s32 1024, 1024
          %143 = vsyncadd [#allocation6], %s142
          %s144 = sshll.u32 [#allocation7], 4
          %s145 = int_to_ptr.vmem [resolvable:$true] %s144
          %150 = dma.hbm_to_vmem [thread:$0]  %s2, 1024, %s145, [#allocation6], 64, 64, 4
        $region20: #{tpu_custom_call.1} parent=11 // pred_fallthru
          _
      $region12: #{tpu_custom_call.1} parent=5 // pred_fallthru
        _
      %p151 = scmp.lt.s32.totalorder %s16, 2
      // Predicated region
      $region21: #{tpu_custom_call.1} parent=5 // pred_check
        %p152 = pneg %p151
      $region22: #{tpu_custom_call.1} parent=5 // pred_check_branch
        %154 = sbr.rel (%p152) target = $region24
      $region23: #{tpu_custom_call.1} parent=5 // pred_region
        // Predicated region
        $region25: #{tpu_custom_call.1} parent=23 // pred_check
          %p155 = pneg %p36
        $region26: #{tpu_custom_call.1} parent=23 // pred_check_branch
          %157 = sbr.rel (%p155) target = $region28
        $region27: #{tpu_custom_call.1} parent=23 // pred_region
          %s158 = sand.u32 %s26, 1
          %s159 = scalar_lea.sflag [#allocation3], %s158
          %s160 = sand.u32 %s26, 1
          %s161 = smul.addr %s160, 80
          %s162 = scalar_lea.vmem [#allocation2], %s161
          %s163 = smul.u32 10, %s16
          %s164 = ssub.s32 18, %s163
          %p165 = scmp.lt.s32.totalorder %s164, 10
          %s166 = scalar_select %p165, %s164, 10
          %s167 = smul.u32 128, %s166
          %s169 = ssub.s32 1280, %s167
          %170 = vsyncadd %s159, %s169
          %p171 = scmp.ne.s32.totalorder 0, %s167
          %s172 = smul.addr %s163, 128
          %s173 = scalar_lea.hbm %s0, %s172
          %s174 = smul.u32 8, %s166
          %s175 = sshll.u32 %s162, 4
          %s176 = int_to_ptr.vmem [resolvable:$true] %s175
          %s177 = sshll.u32 %s174, 4
          %181 = dma.hbm_to_vmem [thread:$0]  (%p171), %s173, %s177, %s176, %s159, 128, 128, 8
        $region28: #{tpu_custom_call.1} parent=23 // pred_fallthru
          _
      $region24: #{tpu_custom_call.1} parent=5 // pred_fallthru
        _
      %p182 = scmp.le.s32.totalorder 1, %s16
      %p183 = scmp.lt.s32.totalorder %s16, 3
      %p184 = pnand %p182, %p183
      %p185 = pneg %p184
      // Predicated region
      $region29: #{tpu_custom_call.1} parent=5 // pred_check
        _
      $region30: #{tpu_custom_call.1} parent=5 // pred_check_branch
        %187 = sbr.rel (%p184) target = $region32
      $region31: #{tpu_custom_call.1} parent=5 // pred_region
        %s188 = ssub.s32 %s16, 1
        %s189 = sand.u32 %s29, 1
        %s190 = scalar_lea.sflag [#allocation3], %s189
        %s191 = sand.u32 %s29, 1
        %s192 = smul.addr %s191, 80
        %s193 = scalar_lea.vmem [#allocation2], %s192
        // Predicated region
        $region33: #{tpu_custom_call.1} parent=31 // pred_check
          %p194 = pneg %p42
        $region34: #{tpu_custom_call.1} parent=31 // pred_check_branch
          %196 = sbr.rel (%p194) target = $region36
        $region35: #{tpu_custom_call.1} parent=31 // pred_region
          %197 = dma.done %s190, 1280
        $region36: #{tpu_custom_call.1} parent=31 // pred_fallthru
          _
        // Predicated region
        $region37: #{tpu_custom_call.1} parent=31 // pred_check
          %p198 = pneg %p63
        $region38: #{tpu_custom_call.1} parent=31 // pred_check_branch
          %200 = sbr.rel (%p198) target = $region40
        $region39: #{tpu_custom_call.1} parent=31 // pred_region
          %201 = dma.done [#allocation6], 1024
        $region40: #{tpu_custom_call.1} parent=31 // pred_fallthru
          _
        // Predicated region
        $region41: #{tpu_custom_call.1} parent=31 // pred_check
          %p202 = pneg %p84
        $region42: #{tpu_custom_call.1} parent=31 // pred_check_branch
          %204 = sbr.rel (%p202) target = $region44
        $region43: #{tpu_custom_call.1} parent=31 // pred_region
          %205 = dma.done [#allocation6], 1024
        $region44: #{tpu_custom_call.1} parent=31 // pred_fallthru
          _
        %s206 = sand.u32 %s29, 1
        %s207 = scalar_lea.sflag [#allocation3], %s206
        %s208 = sand.u32 %s29, 1
        %s209 = smul.addr %s208, 80
        %s210 = scalar_lea.vmem [#allocation2], %s209
        %p211 = pneg %p42
        %p212 = pneg %p39
        %p213 = pneg %p63
        %p214 = pneg %p60
        %p215 = pneg %p84
        %p216 = pneg %p81
        %p217 = pneg %p110
        %p218 = pneg %p107
        %s219 = sand.u32 %s97, 1
        %s220 = scalar_lea.sflag [#allocation4], %s219
        %s221 = sand.u32 %s97, 1
        %s222 = smul.addr %s221, 80
        %s223 = scalar_lea.vmem [#allocation8], %s222
        %s224 = smul.u32 10, %s21
        %s225 = ssub.s32 18, %s224
        %p226 = scmp.lt.s32.totalorder %s225, 10
        %s227 = scalar_select %p226, %s225, 10
        %s228 = smul.u32 128, %s227
        %s229 = smul.u32 10, %s21
        %s230 = ssub.s32 18, %s229
        %p231 = scmp.lt.s32.totalorder %s230, 10
        %s232 = scalar_select %p231, %s230, 10
        %s233 = smul.u32 128, %s232
        %v235 = vld [vmem:[%s193] sm:$0xff]
        %v236 = vld [vmem:[%s193 + $0x8] sm:$0xff]
        %v237 = vld [vmem:[%s193 + $0x10] sm:$0xff]
        %v238 = vld [vmem:[%s193 + $0x18] sm:$0xff]
        %v239 = vld [vmem:[%s193 + $0x20] sm:$0xff]
        %v240 = vld [vmem:[%s193 + $0x28] sm:$0xff]
        %v241 = vld [vmem:[%s193 + $0x30] sm:$0xff]
        %v242 = vld [vmem:[%s193 + $0x38] sm:$0xff]
        %v243 = vld [vmem:[%s193 + $0x40] sm:$0xff]
        %v244 = vld [vmem:[%s193 + $0x48] sm:$0xff]
        %v245 = vpack.c.bf16 %v236, %v235
        %v246 = vpack.c.bf16 %v238, %v237
        %v247 = vpack.c.bf16 %v240, %v239
        %v248 = vpack.c.bf16 %v242, %v241
        %v249 = vpack.c.bf16 %v244, %v243
        %v250 = vld [vmem:[#allocation5] sm:$0xf]
        %v251 = vld [vmem:[#allocation5 + $0x4] sm:$0xf]
        %v252 = vld [vmem:[#allocation5 + $0x8] sm:$0xf]
        %v253 = vld [vmem:[#allocation5 + $0xc] sm:$0xf]
        %v254 = vld [vmem:[#allocation5 + $0x10] sm:$0xf]
        %v255 = vld [vmem:[#allocation5 + $0x14] sm:$0xf]
        %v256 = vld [vmem:[#allocation5 + $0x18] sm:$0xf]
        %v257 = vld [vmem:[#allocation5 + $0x1c] sm:$0xf]
        %v258 = vld [vmem:[#allocation5 + $0x20] sm:$0xf]
        %v259 = vld [vmem:[#allocation5 + $0x24] sm:$0xf]
        %v260 = vld [vmem:[#allocation5 + $0x28] sm:$0xf]
        %v261 = vld [vmem:[#allocation5 + $0x2c] sm:$0xf]
        %v262 = vld [vmem:[#allocation5 + $0x30] sm:$0xf]
        %v263 = vld [vmem:[#allocation5 + $0x34] sm:$0xf]
        %v264 = vld [vmem:[#allocation5 + $0x38] sm:$0xf]
        %v265 = vld [vmem:[#allocation5 + $0x3c] sm:$0xf]
        %v282 = vunpack.c.l.b16 %v250
        %v283 = vunpack.c.l.b16 %v251
        %v284 = vunpack.c.l.b16 %v252
        %v285 = vunpack.c.l.b16 %v253
        %v286 = vunpack.c.l.b16 %v254
        %v287 = vunpack.c.l.b16 %v255
        %v288 = vunpack.c.l.b16 %v256
        %v289 = vunpack.c.l.b16 %v257
        %v290 = vunpack.c.l.b16 %v258
        %v291 = vunpack.c.l.b16 %v259
        %v292 = vunpack.c.l.b16 %v260
        %v293 = vunpack.c.l.b16 %v261
        %v294 = vunpack.c.l.b16 %v262
        %v295 = vunpack.c.l.b16 %v263
        %v296 = vunpack.c.l.b16 %v264
        %v297 = vunpack.c.l.b16 %v265
        %v298 = vpack.c.b16 %v283, %v282
        %v299 = vpack.c.b16 %v285, %v284
        %v300 = vpack.c.b16 %v287, %v286
        %v301 = vpack.c.b16 %v289, %v288
        %v302 = vpack.c.b16 %v291, %v290
        %v303 = vpack.c.b16 %v293, %v292
        %v304 = vpack.c.b16 %v295, %v294
        %v305 = vpack.c.b16 %v297, %v296
        %314 = vmatprep.subr.bf16.mxu0 0
        %315 = vmatpush1.bf16.msra.mxu0 %v298
        %316 = vmatprep.subr.bf16.mxu0 0
        %317 = vmatpush1.bf16.msra.mxu0 %v299
        %318 = vmatprep.subr.bf16.mxu0 0
        %319 = vmatpush1.bf16.msra.mxu0 %v300
        %320 = vmatprep.subr.bf16.mxu0 0
        %321 = vmatpush1.bf16.msra.mxu0 %v301
        %322 = vmatprep.subr.bf16.mxu0 0
        %323 = vmatpush1.bf16.msra.mxu0 %v302
        %324 = vmatprep.subr.bf16.mxu0 0
        %325 = vmatpush1.bf16.msra.mxu0 %v303
        %326 = vmatprep.subr.bf16.mxu0 0
        %327 = vmatpush1.bf16.msra.mxu0 %v304
        %328 = vmatprep.subr.bf16.mxu0 0
        %329 = vmatpush1.bf16.msra.mxu0 %v305
        %330 = vmatprep.subr.bf16.mxu0 0
        %331 = vmatpush1.bf16.msra.mxu0 0
        %332 = vmatprep.subr.bf16.mxu0 0
        %333 = vmatpush1.bf16.msra.mxu0 0
        %334 = vmatprep.subr.bf16.mxu0 0
        %335 = vmatpush1.bf16.msra.mxu0 0
        %336 = vmatprep.subr.bf16.mxu0 0
        %337 = vmatpush1.bf16.msra.mxu0 0
        %338 = vmatprep.subr.bf16.mxu0 0
        %339 = vmatpush1.bf16.msra.mxu0 0
        %340 = vmatprep.subr.bf16.mxu0 0
        %341 = vmatpush1.bf16.msra.mxu0 0
        %342 = vmatprep.subr.bf16.mxu0 0
        %343 = vmatpush1.bf16.msra.mxu0 0
        %344 = vmatprep.subr.bf16.mxu0 0
        %345 = vmatpush1.bf16.msra.mxu0 0
        %346 = vmatprep.mubr.bf16.mxu0 0
        %347 = vmatmul.mubr.bf16.gmra.mrb[0].mxu0 %v245
        %v348 = vpop.f32.mrb[0].mxu0
        %v349 = vadd.f32 0.0, %v348
        %v350 = vpop.f32.mrb[0].mxu0
        %v351 = vpop.f32.mrb[0].mxu0
        %v352 = vadd.f32 0.0, %v351
        %v353 = vpop.f32.mrb[0].mxu0
        %354 = vmatprep.mubr.bf16.mxu0 0
        %355 = vmatmul.mubr.bf16.gmra.mrb[0].mxu0 %v246
        %v356 = vpop.f32.mrb[0].mxu0
        %v357 = vadd.f32 0.0, %v356
        %v358 = vpop.f32.mrb[0].mxu0
        %v359 = vpop.f32.mrb[0].mxu0
        %v360 = vadd.f32 0.0, %v359
        %v361 = vpop.f32.mrb[0].mxu0
        %362 = vmatprep.mubr.bf16.mxu0 0
        %363 = vmatmul.mubr.bf16.gmra.mrb[0].mxu0 %v247
        %v364 = vpop.f32.mrb[0].mxu0
        %v365 = vadd.f32 0.0, %v364
        %v366 = vpop.f32.mrb[0].mxu0
        %v367 = vpop.f32.mrb[0].mxu0
        %v368 = vadd.f32 0.0, %v367
        %v369 = vpop.f32.mrb[0].mxu0
        %370 = vmatprep.mubr.bf16.mxu0 0
        %371 = vmatmul.mubr.bf16.gmra.mrb[0].mxu0 %v248
        %v372 = vpop.f32.mrb[0].mxu0
        %v373 = vadd.f32 0.0, %v372
        %v374 = vpop.f32.mrb[0].mxu0
        %v375 = vpop.f32.mrb[0].mxu0
        %v376 = vadd.f32 0.0, %v375
        %v377 = vpop.f32.mrb[0].mxu0
        %378 = vmatprep.mubr.bf16.mxu0 0
        %379 = vmatmul.mubr.bf16.gmra.mrb[0].mxu0 %v249
        %v380 = vpop.f32.mrb[0].mxu0
        %v381 = vadd.f32 0.0, %v380
        %v382 = vpop.f32.mrb[0].mxu0
        %v383 = vpop.f32.mrb[0].mxu0
        %v384 = vadd.f32 0.0, %v383
        %v385 = vpop.f32.mrb[0].mxu0
        %386 = vdwg.mxu0
        %v387 = vmax.f32 %v349, 0.0
        %v388 = vmax.f32 %v352, 0.0
        %v389 = vmax.f32 %v357, 0.0
        %v390 = vmax.f32 %v360, 0.0
        %v391 = vmax.f32 %v365, 0.0
        %v392 = vmax.f32 %v368, 0.0
        %v393 = vmax.f32 %v373, 0.0
        %v394 = vmax.f32 %v376, 0.0
        %v395 = vmax.f32 %v381, 0.0
        %v396 = vmax.f32 %v384, 0.0
        %v397 = vpack.c.bf16 %v388, %v387
        %v398 = vpack.c.bf16 %v390, %v389
        %v399 = vpack.c.bf16 %v392, %v391
        %v400 = vpack.c.bf16 %v394, %v393
        %v401 = vpack.c.bf16 %v396, %v395
        %v402 = vld [vmem:[#allocation7] sm:$0xf]
        %v403 = vld [vmem:[#allocation7 + $0x4] sm:$0xf]
        %v404 = vld [vmem:[#allocation7 + $0x8] sm:$0xf]
        %v405 = vld [vmem:[#allocation7 + $0xc] sm:$0xf]
        %v406 = vld [vmem:[#allocation7 + $0x10] sm:$0xf]
        %v407 = vld [vmem:[#allocation7 + $0x14] sm:$0xf]
        %v408 = vld [vmem:[#allocation7 + $0x18] sm:$0xf]
        %v409 = vld [vmem:[#allocation7 + $0x1c] sm:$0xf]
        %v410 = vld [vmem:[#allocation7 + $0x20] sm:$0xf]
        %v411 = vld [vmem:[#allocation7 + $0x24] sm:$0xf]
        %v412 = vld [vmem:[#allocation7 + $0x28] sm:$0xf]
        %v413 = vld [vmem:[#allocation7 + $0x2c] sm:$0xf]
        %v414 = vld [vmem:[#allocation7 + $0x30] sm:$0xf]
        %v415 = vld [vmem:[#allocation7 + $0x34] sm:$0xf]
        %v416 = vld [vmem:[#allocation7 + $0x38] sm:$0xf]
        %v417 = vld [vmem:[#allocation7 + $0x3c] sm:$0xf]
        %v434 = vunpack.c.l.b16 %v402
        %v435 = vunpack.c.l.b16 %v403
        %v436 = vunpack.c.l.b16 %v404
        %v437 = vunpack.c.l.b16 %v405
        %v438 = vunpack.c.l.b16 %v406
        %v439 = vunpack.c.l.b16 %v407
        %v440 = vunpack.c.l.b16 %v408
        %v441 = vunpack.c.l.b16 %v409
        %v442 = vunpack.c.l.b16 %v410
        %v443 = vunpack.c.l.b16 %v411
        %v444 = vunpack.c.l.b16 %v412
        %v445 = vunpack.c.l.b16 %v413
        %v446 = vunpack.c.l.b16 %v414
        %v447 = vunpack.c.l.b16 %v415
        %v448 = vunpack.c.l.b16 %v416
        %v449 = vunpack.c.l.b16 %v417
        %v450 = vpack.c.b16 %v435, %v434
        %v451 = vpack.c.b16 %v437, %v436
        %v452 = vpack.c.b16 %v439, %v438
        %v453 = vpack.c.b16 %v441, %v440
        %v454 = vpack.c.b16 %v443, %v442
        %v455 = vpack.c.b16 %v445, %v444
        %v456 = vpack.c.b16 %v447, %v446
        %v457 = vpack.c.b16 %v449, %v448
        %466 = vmatprep.subr.bf16.mxu0 0
        %467 = vmatpush1.bf16.msra.mxu0 %v450
        %468 = vmatprep.subr.bf16.mxu0 0
        %469 = vmatpush1.bf16.msra.mxu0 %v451
        %470 = vmatprep.subr.bf16.mxu0 0
        %471 = vmatpush1.bf16.msra.mxu0 %v452
        %472 = vmatprep.subr.bf16.mxu0 0
        %473 = vmatpush1.bf16.msra.mxu0 %v453
        %474 = vmatprep.subr.bf16.mxu0 0
        %475 = vmatpush1.bf16.msra.mxu0 %v454
        %476 = vmatprep.subr.bf16.mxu0 0
        %477 = vmatpush1.bf16.msra.mxu0 %v455
        %478 = vmatprep.subr.bf16.mxu0 0
        %479 = vmatpush1.bf16.msra.mxu0 %v456
        %480 = vmatprep.subr.bf16.mxu0 0
        %481 = vmatpush1.bf16.msra.mxu0 %v457
        %482 = vmatprep.subr.bf16.mxu0 0
        %483 = vmatpush1.bf16.msra.mxu0 0
        %484 = vmatprep.subr.bf16.mxu0 0
        %485 = vmatpush1.bf16.msra.mxu0 0
        %486 = vmatprep.subr.bf16.mxu0 0
        %487 = vmatpush1.bf16.msra.mxu0 0
        %488 = vmatprep.subr.bf16.mxu0 0
        %489 = vmatpush1.bf16.msra.mxu0 0
        %490 = vmatprep.subr.bf16.mxu0 0
        %491 = vmatpush1.bf16.msra.mxu0 0
        %492 = vmatprep.subr.bf16.mxu0 0
        %493 = vmatpush1.bf16.msra.mxu0 0
        %494 = vmatprep.subr.bf16.mxu0 0
        %495 = vmatpush1.bf16.msra.mxu0 0
        %496 = vmatprep.subr.bf16.mxu0 0
        %497 = vmatpush1.bf16.msra.mxu0 0
        %498 = vmatprep.mubr.bf16.mxu0 0
        %499 = vmatmul.mubr.bf16.gmra.mrb[0].mxu0 %v397
        %v500 = vpop.f32.mrb[0].mxu0
        %v501 = vadd.f32 0.0, %v500
        %v502 = vpop.f32.mrb[0].mxu0
        %v503 = vpop.f32.mrb[0].mxu0
        %v504 = vadd.f32 0.0, %v503
        %v505 = vpop.f32.mrb[0].mxu0
        %506 = vmatprep.mubr.bf16.mxu0 0
        %507 = vmatmul.mubr.bf16.gmra.mrb[0].mxu0 %v398
        %v508 = vpop.f32.mrb[0].mxu0
        %v509 = vadd.f32 0.0, %v508
        %v510 = vpop.f32.mrb[0].mxu0
        %v511 = vpop.f32.mrb[0].mxu0
        %v512 = vadd.f32 0.0, %v511
        %v513 = vpop.f32.mrb[0].mxu0
        %514 = vmatprep.mubr.bf16.mxu0 0
        %515 = vmatmul.mubr.bf16.gmra.mrb[0].mxu0 %v399
        %v516 = vpop.f32.mrb[0].mxu0
        %v517 = vadd.f32 0.0, %v516
        %v518 = vpop.f32.mrb[0].mxu0
        %v519 = vpop.f32.mrb[0].mxu0
        %v520 = vadd.f32 0.0, %v519
        %v521 = vpop.f32.mrb[0].mxu0
        %522 = vmatprep.mubr.bf16.mxu0 0
        %523 = vmatmul.mubr.bf16.gmra.mrb[0].mxu0 %v400
        %v524 = vpop.f32.mrb[0].mxu0
        %v525 = vadd.f32 0.0, %v524
        %v526 = vpop.f32.mrb[0].mxu0
        %v527 = vpop.f32.mrb[0].mxu0
        %v528 = vadd.f32 0.0, %v527
        %v529 = vpop.f32.mrb[0].mxu0
        %530 = vmatprep.mubr.bf16.mxu0 0
        %531 = vmatmul.mubr.bf16.gmra.mrb[0].mxu0 %v401
        %v532 = vpop.f32.mrb[0].mxu0
        %v533 = vadd.f32 0.0, %v532
        %v534 = vpop.f32.mrb[0].mxu0
        %v535 = vpop.f32.mrb[0].mxu0
        %v536 = vadd.f32 0.0, %v535
        %v537 = vpop.f32.mrb[0].mxu0
        %538 = vdwg.mxu0
        %v539 = vsub.f32 0.0, %v501
        %v540 = vsub.f32 0.0, %v504
        %v541 = vsub.f32 0.0, %v509
        %v542 = vsub.f32 0.0, %v512
        %v543 = vsub.f32 0.0, %v517
        %v544 = vsub.f32 0.0, %v520
        %v545 = vsub.f32 0.0, %v525
        %v546 = vsub.f32 0.0, %v528
        %v547 = vsub.f32 0.0, %v533
        %v548 = vsub.f32 0.0, %v536
        %v549 = vmul.f32 %v539, 1.442695
        %v550 = vpow.pop %v549
        %v551 = vmul.f32 %v540, 1.442695
        %v552 = vpow.pop %v551
        %v553 = vmul.f32 %v541, 1.442695
        %v554 = vpow.pop %v553
        %v555 = vmul.f32 %v542, 1.442695
        %v556 = vpow.pop %v555
        %v557 = vmul.f32 %v543, 1.442695
        %v558 = vpow.pop %v557
        %v559 = vmul.f32 %v544, 1.442695
        %v560 = vpow.pop %v559
        %v561 = vmul.f32 %v545, 1.442695
        %v562 = vpow.pop %v561
        %v563 = vmul.f32 %v546, 1.442695
        %v564 = vpow.pop %v563
        %v565 = vmul.f32 %v547, 1.442695
        %v566 = vpow.pop %v565
        %v567 = vmul.f32 %v548, 1.442695
        %v568 = vpow.pop %v567
        %v569 = vadd.f32 %v550, 1.0
        %v570 = vadd.f32 %v552, 1.0
        %v571 = vadd.f32 %v554, 1.0
        %v572 = vadd.f32 %v556, 1.0
        %v573 = vadd.f32 %v558, 1.0
        %v574 = vadd.f32 %v560, 1.0
        %v575 = vadd.f32 %v562, 1.0
        %v576 = vadd.f32 %v564, 1.0
        %v577 = vadd.f32 %v566, 1.0
        %v578 = vadd.f32 %v568, 1.0
        %v579 = vrcp.pop %v569
        %v580 = vrcp.pop %v570
        %v581 = vrcp.pop %v571
        %v582 = vrcp.pop %v572
        %v583 = vrcp.pop %v573
        %v584 = vrcp.pop %v574
        %v585 = vrcp.pop %v575
        %v586 = vrcp.pop %v576
        %v587 = vrcp.pop %v577
        %v588 = vrcp.pop %v578
        %v589 = vmul.f32 %v579, %v235
        %v590 = vmul.f32 %v580, %v236
        %v591 = vmul.f32 %v581, %v237
        %v592 = vmul.f32 %v582, %v238
        %v593 = vmul.f32 %v583, %v239
        %v594 = vmul.f32 %v584, %v240
        %v595 = vmul.f32 %v585, %v241
        %v596 = vmul.f32 %v586, %v242
        %v597 = vmul.f32 %v587, %v243
        %v598 = vmul.f32 %v588, %v244
        %599 = vst [vmem:[%s223] sm:$0xff] %v589
        %600 = vst [vmem:[%s223 + $0x8] sm:$0xff] %v590
        %601 = vst [vmem:[%s223 + $0x10] sm:$0xff] %v591
        %602 = vst [vmem:[%s223 + $0x18] sm:$0xff] %v592
        %603 = vst [vmem:[%s223 + $0x20] sm:$0xff] %v593
        %604 = vst [vmem:[%s223 + $0x28] sm:$0xff] %v594
        %605 = vst [vmem:[%s223 + $0x30] sm:$0xff] %v595
        %606 = vst [vmem:[%s223 + $0x38] sm:$0xff] %v596
        %607 = vst [vmem:[%s223 + $0x40] sm:$0xff] %v597
        %608 = vst [vmem:[%s223 + $0x48] sm:$0xff] %v598
        %s609 = sand.u32 %s97, 1
        %s610 = scalar_lea.sflag [#allocation4], %s609
        %s611 = sand.u32 %s97, 1
        %s612 = smul.addr %s611, 80
        %s613 = scalar_lea.vmem [#allocation8], %s612
        // Predicated region
        $region45: #{tpu_custom_call.1} parent=31 // pred_check
          %p614 = pneg %p107
        $region46: #{tpu_custom_call.1} parent=31 // pred_check_branch
          %616 = sbr.rel (%p614) target = $region48
        $region47: #{tpu_custom_call.1} parent=31 // pred_region
          %s617 = smul.u32 10, %s21
          %s618 = ssub.s32 18, %s617
          %p619 = scmp.lt.s32.totalorder %s618, 10
          %s620 = scalar_select %p619, %s618, 10
          %s621 = smul.u32 128, %s620
          %s623 = ssub.s32 1280, %s621
          %624 = vsyncadd %s610, %s623
          %p625 = scmp.ne.s32.totalorder 0, %s621
          %s626 = smul.addr %s617, 128
          %s627 = scalar_lea.hbm %s3, %s626
          %s628 = smul.u32 8, %s620
          %s629 = sshll.u32 %s613, 4
          %s630 = int_to_ptr.vmem [resolvable:$true] %s629
          %s631 = sshll.u32 %s628, 4
          %635 = dma.vmem_to_hbm [thread:$0]  (%p625), %s630, %s631, %s627, %s610, 128, 128, 8
        $region48: #{tpu_custom_call.1} parent=31 // pred_fallthru
          _
      $region32: #{tpu_custom_call.1} parent=5 // pred_fallthru
        _
      %p636 = scmp.le.s32.totalorder 2, %s16
      // Predicated region
      $region49: #{tpu_custom_call.1} parent=5 // pred_check
        %p637 = pneg %p636
      $region50: #{tpu_custom_call.1} parent=5 // pred_check_branch
        %639 = sbr.rel (%p637) target = $region52
      $region51: #{tpu_custom_call.1} parent=5 // pred_region
        %s640 = ssub.s32 %s16, 2
        // Predicated region
        $region53: #{tpu_custom_call.1} parent=51 // pred_check
          %p641 = pneg %p113
        $region54: #{tpu_custom_call.1} parent=51 // pred_check_branch
          %643 = sbr.rel (%p641) target = $region56
        $region55: #{tpu_custom_call.1} parent=51 // pred_region
          %s644 = sand.u32 %s98, 1
          %s645 = scalar_lea.sflag [#allocation4], %s644
          %s646 = sand.u32 %s98, 1
          %s647 = smul.addr %s646, 80
          %s648 = scalar_lea.vmem [#allocation8], %s647
          %649 = dma.done %s645, 1280
        $region56: #{tpu_custom_call.1} parent=51 // pred_fallthru
          _
      $region52: #{tpu_custom_call.1} parent=5 // pred_fallthru
        _
    $region6: #{tpu_custom_call.1} parent=1 // loop_footer
      %s20 = sadd.s32 1, %s16
    $region7: #{tpu_custom_call.1} parent=1 // loop_footer_branch
      %15 = sbr.rel target = $region3
    $region8: #{tpu_custom_call.1} parent=1 // loop_exit
      _
    %650 = vsyncpa [#allocation3], 1
    %s651 = scalar_lea.sflag [#allocation3], 1
    %652 = vsyncpa %s651, 1
    %653 = vsyncpa [#allocation6], 1
    %654 = vsyncpa [#allocation4], 1
    %s655 = scalar_lea.sflag [#allocation4], 1
    %656 = vsyncpa %s655, 1

</llo_original>
